<compile_context>
chip_gen: v7x
topology: tpu7x:2x2x1
jax: 0.10.0
libtpu: 0.0.40
codegen_flags: <defaults>
</compile_context>

<pallas_src>
import functools

import jax
import jax.numpy as jnp
import numpy as np
from jax import lax
from jax.experimental import pallas as pl
from jax.experimental.pallas import tpu as pltpu


def _pair(v):
    if isinstance(v, (tuple, list)):
        assert len(v) == 2
        return (int(v[0]), int(v[1]))
    return (int(v), int(v))


def _round_up(x, m):
    return ((x + m - 1) // m) * m


# ----------------------------------------------------------------------------
# Pallas kernel.  One grid step = (batch n, kernel tap k, P-tile t).
#   x_ref   : (C, H*W)   bf16, resident across k/t (block index only depends on n)
#   h_ref   : (dg, TP)   f32 sampling row coordinates for this tap / tile
#   w_ref   : (dg, TP)   f32 sampling col coordinates
#   out_ref : (C, TP)    f32 sampled columns for this tap / tile
# ----------------------------------------------------------------------------
def _deform_unfold_kernel(x_ref, h_ref, w_ref, out_ref, *, H, W, dg):
    C, HW = x_ref.shape
    Cg = C // dg
    TP = out_ref.shape[1]

    # Factored path needs a layout-preserving (H, W, TP) -> (HW, TP) collapse,
    # which holds when W is a multiple of the 8-row sublane tile.
    factored = (W % 8 == 0)
    if factored:
        gy = lax.broadcasted_iota(jnp.int32, (H, 1), 0).astype(jnp.float32)  # (H,1)
        gx = lax.broadcasted_iota(jnp.int32, (W, 1), 0).astype(jnp.float32)  # (W,1)
    else:
        q = lax.broadcasted_iota(jnp.int32, (HW, 1), 0)                      # (HW,1)
        gy_f = (q // W).astype(jnp.float32)
        gx_f = (q % W).astype(jnp.float32)

    for g in range(dg):
        hk = h_ref[g:g + 1, :]                                   # (1, TP)
        wk = w_ref[g:g + 1, :]                                   # (1, TP)
        # DCN validity window: samples fully outside (-1, H)x(-1, W) are zeroed.
        valid = ((hk > -1.0) & (hk < float(H)) &
                 (wk > -1.0) & (wk < float(W))).astype(jnp.float32)  # (1, TP)

        if factored:
            # Small per-axis tent factors; validity folded into the row factor.
            wy = jnp.maximum(1.0 - jnp.abs(hk - gy), 0.0) * valid    # (H, TP)
            wx = jnp.maximum(1.0 - jnp.abs(wk - gx), 0.0)            # (W, TP)
            wt = (wy[:, None, :] * wx[None, :, :]).reshape(HW, TP)   # (HW, TP)
        else:
            wy = jnp.maximum(1.0 - jnp.abs(hk - gy_f), 0.0)          # (HW, TP)
            wx = jnp.maximum(1.0 - jnp.abs(wk - gx_f), 0.0)
            wt = wy * wx * valid

        # Bilinear gather == dense contraction over source pixels on the MXU.
        xc = x_ref[g * Cg:(g + 1) * Cg, :]                           # (Cg, HW) bf16
        out_ref[g * Cg:(g + 1) * Cg, :] = jnp.dot(
            xc, wt.astype(jnp.bfloat16), preferred_element_type=jnp.float32)


# ----------------------------------------------------------------------------
# Wrapper: coordinate precompute, P padding/tiling, pallas_call plumbing.
# ----------------------------------------------------------------------------
def deform_unfold(x, offset, kernel_size, stride=1, padding=0, dilation=1,
                  deformable_groups=1):
    kh, kw = _pair(kernel_size)
    sh, sw = _pair(stride)
    ph, pw = _pair(padding)
    dh, dw = _pair(dilation)
    dg = int(deformable_groups)

    N, C, H, W = x.shape
    assert C % dg == 0
    H_out = (H + 2 * ph - (dh * (kh - 1) + 1)) // sh + 1
    W_out = (W + 2 * pw - (dw * (kw - 1) + 1)) // sw + 1
    K = kh * kw
    P = H_out * W_out
    HW = H * W
    assert offset.shape == (N, dg * 2 * K, H_out, W_out)

    # Lane-dense output: pad P to a multiple of 128 and tile it.  TP = 256 is a
    # safe tile for all generations (fits v7x's smaller VMEM per the review).
    P_pad = _round_up(max(P, 1), 128)
    TP = 256 if (P_pad % 256 == 0) else 128
    T = P_pad // TP

    # bf16 image for native-rate MXU; accumulation stays f32 in the kernel.
    x_flat = x.reshape(N, C, HW).astype(jnp.bfloat16)

    off = offset.reshape(N, dg, K, 2, P).astype(jnp.float32)

    # Base (un-deformed) sampling grid per kernel tap k and output position p.
    i_idx = jnp.repeat(jnp.arange(kh), kw)                     # (K,)
    j_idx = jnp.tile(jnp.arange(kw), kh)                       # (K,)
    ho = jnp.repeat(jnp.arange(H_out), W_out)                  # (P,) p = ho*W_out+wo
    wo = jnp.tile(jnp.arange(W_out), H_out)                    # (P,)
    base_h = (ho[None, :] * sh - ph + i_idx[:, None] * dh).astype(jnp.float32)
    base_w = (wo[None, :] * sw - pw + j_idx[:, None] * dw).astype(jnp.float32)

    # Full sampling coordinates (one fused XLA add), laid out (N, K, dg, P_pad)
    # so that a per-tap, per-tile block is simply (dg, TP).
    h_coord = jnp.transpose(base_h[None, None] + off[:, :, :, 0, :], (0, 2, 1, 3))
    w_coord = jnp.transpose(base_w[None, None] + off[:, :, :, 1, :], (0, 2, 1, 3))
    if P_pad != P:
        pad_cfg = ((0, 0), (0, 0), (0, 0), (0, P_pad - P))
        # -2 keeps both tent weights and the validity mask exactly zero.
        h_coord = jnp.pad(h_coord, pad_cfg, constant_values=-2.0)
        w_coord = jnp.pad(w_coord, pad_cfg, constant_values=-2.0)

    kernel = functools.partial(_deform_unfold_kernel, H=H, W=W, dg=dg)

    out = pl.pallas_call(
        kernel,
        out_shape=jax.ShapeDtypeStruct((N, C, K * P_pad), jnp.float32),
        grid=(N, K, T),
        in_specs=[
            # image: resident across the inner k/t axes (block index only uses n)
            pl.BlockSpec((None, C, HW), lambda n, k, t: (n, 0, 0)),
            # per-tap / per-tile sampling coordinates
            pl.BlockSpec((None, None, dg, TP), lambda n, k, t: (n, k, 0, t)),
            pl.BlockSpec((None, None, dg, TP), lambda n, k, t: (n, k, 0, t)),
        ],
        out_specs=pl.BlockSpec((None, C, TP), lambda n, k, t: (n, 0, k * T + t)),
        compiler_params=pltpu.CompilerParams(
            dimension_semantics=("parallel", "parallel", "parallel")),
    )(x_flat, h_coord, w_coord)

    # (N, C, K*P_pad) -> (N, C, K, P) -> (N, C*K, P): column order c*K + i*kw + j
    out = out.reshape(N, C, K, P_pad)[..., :P]
    return out.reshape(N, C * K, P)


class DeformUnfold:
    """Mirror of the PyTorch module (no learnable parameters, bias=False)."""

    def __init__(self, kernel_size, stride=1, padding=0, dilation=1,
                 deformable_groups=1, bias=False):
        assert not bias
        self.kernel_size = _pair(kernel_size)
        self.stride = _pair(stride)
        self.padding = _pair(padding)
        self.dilation = _pair(dilation)
        self.deformable_groups = deformable_groups

    def __call__(self, x, offset):
        return deform_unfold(x, offset, self.kernel_size, self.stride,
                             self.padding, self.dilation,
                             self.deformable_groups)


# ----------------------------------------------------------------------------
# Pure-JAX reference (explicit floor/gather bilinear), for verification only.
# ----------------------------------------------------------------------------
def _reference_deform_unfold(x, offset, kernel_size, stride, padding, dilation,
                             deformable_groups):
    kh, kw = _pair(kernel_size)
    sh, sw = _pair(stride)
    ph, pw = _pair(padding)
    dh, dw = _pair(dilation)
    dg = deformable_groups
    N, C, H, W = x.shape
    H_out = (H + 2 * ph - (dh * (kh - 1) + 1)) // sh + 1
    W_out = (W + 2 * pw - (dw * (kw - 1) + 1)) // sw + 1
    K = kh * kw
    P = H_out * W_out
    Cg = C // dg

    off = offset.reshape(N, dg, K, 2, P).astype(jnp.float32)
    i_idx = jnp.repeat(jnp.arange(kh), kw)
    j_idx = jnp.tile(jnp.arange(kw), kh)
    ho = jnp.repeat(jnp.arange(H_out), W_out)
    wo = jnp.tile(jnp.arange(W_out), H_out)
    base_h = (ho[None, :] * sh - ph + i_idx[:, None] * dh).astype(jnp.float32)
    base_w = (wo[None, :] * sw - pw + j_idx[:, None] * dw).astype(jnp.float32)

    h = base_h[None, None] + off[:, :, :, 0, :]               # (N, dg, K, P)
    w = base_w[None, None] + off[:, :, :, 1, :]
    valid = ((h > -1) & (h < H) & (w > -1) & (w < W)).astype(jnp.float32)

    h0 = jnp.floor(h)
    w0 = jnp.floor(w)
    lh = h - h0
    lw = w - w0

    xf = x.astype(jnp.float32).reshape(N, dg, Cg, H * W)

    def corner(hc, wc, wt):
        inb = ((hc >= 0) & (hc <= H - 1) & (wc >= 0) & (wc <= W - 1))
        hi = jnp.clip(hc, 0, H - 1).astype(jnp.int32)
        wi = jnp.clip(wc, 0, W - 1).astype(jnp.int32)
        idx = (hi * W + wi).reshape(N, dg, 1, K * P)
        vals = jnp.take_along_axis(
            xf, jnp.broadcast_to(idx, (N, dg, Cg, K * P)), axis=-1)
        scale = (wt * inb.astype(jnp.float32)).reshape(N, dg, 1, K * P)
        return vals * scale

    out = (corner(h0, w0, (1 - lh) * (1 - lw)) +
           corner(h0, w0 + 1, (1 - lh) * lw) +
           corner(h0 + 1, w0, lh * (1 - lw)) +
           corner(h0 + 1, w0 + 1, lh * lw))
    out = out * valid.reshape(N, dg, 1, K * P)
    return out.reshape(N, dg, Cg, K, P).reshape(N, C * K, P)


if __name__ == "__main__":
    key = jax.random.PRNGKey(0)
    k_x, k_off = jax.random.split(key)

    N, C, H, W = 2, 4, 16, 16
    kernel_size, stride, padding, dilation, dg = 3, 1, 1, 1, 1
    kh, kw = _pair(kernel_size)
    H_out = (H + 2 * padding - (dilation * (kh - 1) + 1)) // stride + 1
    W_out = (W + 2 * padding - (dilation * (kw - 1) + 1)) // stride + 1

    x = jax.random.normal(k_x, (N, C, H, W), dtype=jnp.float32)
    offset = 2.0 * jax.random.normal(
        k_off, (N, dg * 2 * kh * kw, H_out, W_out), dtype=jnp.float32)

    mod = DeformUnfold(kernel_size, stride=stride, padding=padding,
                       dilation=dilation, deformable_groups=dg, bias=False)
    out = mod(x, offset)
    out = jax.block_until_ready(out)

    assert out.shape == (N, C * kh * kw, H_out * W_out), out.shape

    ref = _reference_deform_unfold(x, offset, kernel_size, stride, padding,
                                   dilation, dg)
    # Tolerance accounts for bf16 MXU inputs (image + tent weights); f32 accumulate.
    np.testing.assert_allclose(np.asarray(out), np.asarray(ref),
                               atol=3e-2, rtol=3e-2)

    print("KERNEL_OK")
</pallas_src>

<mosaic_0001>
module attributes {stable_mosaic.version = 11 : i64} {
  func.func @_deform_unfold_kernel(%arg0: i32, %arg1: i32, %arg2: i32, %arg3: memref<1x4x256xbf16, #tpu.memory_space<vmem>>, %arg4: memref<1x1x1x256xf32, #tpu.memory_space<vmem>>, %arg5: memref<1x1x1x256xf32, #tpu.memory_space<vmem>>, %arg6: memref<1x4x256xf32, #tpu.memory_space<vmem>>) attributes {dimension_semantics = [#tpu.dimension_semantics<parallel>, #tpu.dimension_semantics<parallel>, #tpu.dimension_semantics<parallel>], iteration_bounds = array<i64: 2, 9, 1>, scalar_prefetch = 0 : i64, scratch_operands = 0 : i64, tpu.core_type = #tpu.core_type<tc>, window_params = [{transform_indices = @transform_0, window_bounds = array<i64: 1, 4, 256>}, {transform_indices = @transform_1, window_bounds = array<i64: 1, 1, 1, 256>}, {transform_indices = @transform_2, window_bounds = array<i64: 1, 1, 1, 256>}, {transform_indices = @transform_3, window_bounds = array<i64: 1, 4, 256>}]} {
    %0 = tpu.iota {dimensions = array<i32: 0>} : vector<16x1xi32>
    %1 = arith.sitofp %0 : vector<16x1xi32> to vector<16x1xf32>
    %2 = tpu.iota {dimensions = array<i32: 0>} : vector<16x1xi32>
    %3 = arith.sitofp %2 : vector<16x1xi32> to vector<16x1xf32>
    %c0 = arith.constant 0 : index
    %c0_0 = arith.constant 0 : index
    %c0_1 = arith.constant 0 : index
    %c0_2 = arith.constant 0 : index
    %4 = vector.load %arg4[%c0, %c0_0, %c0_1, %c0_2] : memref<1x1x1x256xf32, #tpu.memory_space<vmem>>, vector<1x1x1x256xf32>
    %5 = vector.shape_cast %4 : vector<1x1x1x256xf32> to vector<1x256xf32>
    %c0_3 = arith.constant 0 : index
    %c0_4 = arith.constant 0 : index
    %c0_5 = arith.constant 0 : index
    %c0_6 = arith.constant 0 : index
    %6 = vector.load %arg5[%c0_3, %c0_4, %c0_5, %c0_6] : memref<1x1x1x256xf32, #tpu.memory_space<vmem>>, vector<1x1x1x256xf32>
    %7 = vector.shape_cast %6 : vector<1x1x1x256xf32> to vector<1x256xf32>
    %cst = arith.constant -1.000000e+00 : f32
    %8 = vector.broadcast %cst : f32 to vector<1x256xf32>
    %9 = arith.cmpf ogt, %5, %8 : vector<1x256xf32>
    %cst_7 = arith.constant 1.600000e+01 : f32
    %10 = vector.broadcast %cst_7 : f32 to vector<1x256xf32>
    %11 = arith.cmpf olt, %5, %10 : vector<1x256xf32>
    %12 = arith.andi %9, %11 : vector<1x256xi1>
    %cst_8 = arith.constant -1.000000e+00 : f32
    %13 = vector.broadcast %cst_8 : f32 to vector<1x256xf32>
    %14 = arith.cmpf ogt, %7, %13 : vector<1x256xf32>
    %15 = arith.andi %12, %14 : vector<1x256xi1>
    %cst_9 = arith.constant 1.600000e+01 : f32
    %16 = vector.broadcast %cst_9 : f32 to vector<1x256xf32>
    %17 = arith.cmpf olt, %7, %16 : vector<1x256xf32>
    %18 = arith.andi %15, %17 : vector<1x256xi1>
    %19 = arith.extui %18 : vector<1x256xi1> to vector<1x256xi32>
    %20 = arith.sitofp %19 : vector<1x256xi32> to vector<1x256xf32>
    %21 = vector.broadcast %5 : vector<1x256xf32> to vector<16x256xf32>
    %22 = vector.broadcast %1 : vector<16x1xf32> to vector<16x256xf32>
    %23 = arith.subf %21, %22 : vector<16x256xf32>
    %24 = math.absf %23 : vector<16x256xf32>
    %cst_10 = arith.constant 1.000000e+00 : f32
    %25 = vector.broadcast %cst_10 : f32 to vector<16x256xf32>
    %26 = arith.subf %25, %24 : vector<16x256xf32>
    %cst_11 = arith.constant 0.000000e+00 : f32
    %27 = vector.broadcast %cst_11 : f32 to vector<16x256xf32>
    %28 = arith.maximumf %26, %27 : vector<16x256xf32>
    %29 = vector.broadcast %20 : vector<1x256xf32> to vector<16x256xf32>
    %30 = arith.mulf %28, %29 : vector<16x256xf32>
    %31 = vector.broadcast %7 : vector<1x256xf32> to vector<16x256xf32>
    %32 = vector.broadcast %3 : vector<16x1xf32> to vector<16x256xf32>
    %33 = arith.subf %31, %32 : vector<16x256xf32>
    %34 = math.absf %33 : vector<16x256xf32>
    %cst_12 = arith.constant 1.000000e+00 : f32
    %35 = vector.broadcast %cst_12 : f32 to vector<16x256xf32>
    %36 = arith.subf %35, %34 : vector<16x256xf32>
    %cst_13 = arith.constant 0.000000e+00 : f32
    %37 = vector.broadcast %cst_13 : f32 to vector<16x256xf32>
    %38 = arith.maximumf %36, %37 : vector<16x256xf32>
    %39 = vector.shape_cast %30 : vector<16x256xf32> to vector<16x1x256xf32>
    %40 = vector.shape_cast %38 : vector<16x256xf32> to vector<1x16x256xf32>
    %41 = vector.broadcast %39 : vector<16x1x256xf32> to vector<16x16x256xf32>
    %42 = vector.broadcast %40 : vector<1x16x256xf32> to vector<16x16x256xf32>
    %43 = arith.mulf %41, %42 : vector<16x16x256xf32>
    %44 = vector.shape_cast %43 : vector<16x16x256xf32> to vector<256x256xf32>
    %c0_14 = arith.constant 0 : index
    %c0_15 = arith.constant 0 : index
    %c0_16 = arith.constant 0 : index
    %45 = vector.load %arg3[%c0_14, %c0_15, %c0_16] : memref<1x4x256xbf16, #tpu.memory_space<vmem>>, vector<1x4x256xbf16>
    %46 = vector.shape_cast %45 : vector<1x4x256xbf16> to vector<4x256xbf16>
    %47 = arith.truncf %44 : vector<256x256xf32> to vector<256x256xbf16>
    %cst_17 = arith.constant dense<0.000000e+00> : vector<4x256xf32>
    %48 = tpu.matmul %46, %47, %cst_17 {dimension_numbers = #tpu.dot_dimension_numbers<[1], [0], [0], [1], [0, 0, 1, 1], [], []>} : vector<4x256xbf16>, vector<256x256xbf16>, vector<4x256xf32> -> vector<4x256xf32>
    %c0_18 = arith.constant 0 : index
    %c0_19 = arith.constant 0 : index
    %c0_20 = arith.constant 0 : index
    %49 = vector.load %arg6[%c0_18, %c0_19, %c0_20] : memref<1x4x256xf32, #tpu.memory_space<vmem>>, vector<1x4x256xf32>
    %50 = vector.shape_cast %49 : vector<1x4x256xf32> to vector<4x256xf32>
    %51 = vector.shape_cast %48 : vector<4x256xf32> to vector<1x4x256xf32>
    tpu.vector_store %arg6[%c0_18, %c0_19, %c0_20], %51 {strides = array<i32>} : memref<1x4x256xf32, #tpu.memory_space<vmem>>, vector<1x4x256xf32>,
    return
  }
  func.func @transform_0(%arg0: i32, %arg1: i32, %arg2: i32) -> (i32, i32, i32) {
    %c0_i32 = arith.constant 0 : i32
    %c0_i32_0 = arith.constant 0 : i32
    %c0_i32_1 = arith.constant 0 : i32
    return %arg0, %c0_i32, %c0_i32_0 : i32, i32, i32
  }
  func.func @transform_1(%arg0: i32, %arg1: i32, %arg2: i32) -> (i32, i32, i32, i32) {
    %c0_i32 = arith.constant 0 : i32
    %c0_i32_0 = arith.constant 0 : i32
    return %arg0, %arg1, %c0_i32, %arg2 : i32, i32, i32, i32
  }
  func.func @transform_2(%arg0: i32, %arg1: i32, %arg2: i32) -> (i32, i32, i32, i32) {
    %c0_i32 = arith.constant 0 : i32
    %c0_i32_0 = arith.constant 0 : i32
    return %arg0, %arg1, %c0_i32, %arg2 : i32, i32, i32, i32
  }
  func.func @transform_3(%arg0: i32, %arg1: i32, %arg2: i32) -> (i32, i32, i32) {
    %c1_i32 = arith.constant 1 : i32
    %0 = arith.muli %arg1, %c1_i32 : i32
    %1 = arith.addi %0, %arg2 : i32
    %c0_i32 = arith.constant 0 : i32
    %c0_i32_0 = arith.constant 0 : i32
    return %arg0, %c0_i32, %1 : i32, i32, i32
  }
}

</mosaic_0001>

<llo_original>
// kernel: tpu_custom_call.1
$region0: #{tpu_custom_call.1}
  #allocation0 [shape = 'u32[]', space=smem, size = 0x4, offset = 0x4, fixed_abs, tag = 'smem constant byte address 0x4 - core index']
  #allocation1 [shape = 'u32[144,128]{1,0:T(1,128)}', space=vmem, size = 0x12000, scoped, tag = 'internal scratch']
  %s0 = inlined_call_operand.hbm [shape: bf16[2,4,256], index: 0, kind: input, shape index: {}]
  %s1 = inlined_call_operand.hbm [shape: f32[2,9,1,256], index: 1, kind: input, shape index: {}]
  %s2 = inlined_call_operand.hbm [shape: f32[2,9,1,256], index: 2, kind: input, shape index: {}]
  %s3 = inlined_call_operand.hbm [shape: f32[2,4,2304], index: 3, kind: output, shape index: {}]
  %s4 = sld [smem:[#allocation0]]
  $region57: #{tpu_custom_call.1} parent=0
    _
  %s6 = ssub.s32 1, %s4
  %s7 = scalar_select 0, %s6, %s4
  $region1: #{tpu_custom_call.1} parent=0
    #allocation2 [shape = 'u8[4096]{0}', space=vmem, size = 0x1000, scoped, tag = 'input window, operand 0']
    #allocation3 [shape = 's32[2]{0}', space=sflag, size = 0x8, scoped, tag = 'scoped memory for tpu_custom_call.1']
    #allocation4 [shape = 's32[2]{0}', space=sflag, size = 0x8, scoped, tag = 'scoped memory for tpu_custom_call.1']
    #allocation5 [shape = 'u8[2048]{0}', space=vmem, size = 0x800, scoped, tag = 'input window, operand 1']
    #allocation6 [shape = 's32[2]{0}', space=sflag, size = 0x8, scoped, tag = 'scoped memory for tpu_custom_call.1']
    #allocation7 [shape = 'u8[2048]{0}', space=vmem, size = 0x800, scoped, tag = 'input window, operand 2']
    #allocation8 [shape = 'u8[8192]{0}', space=vmem, size = 0x2000, scoped, tag = 'output window, operand 0']
    %8 = vsyncpa [#allocation3], 0
    %s9 = scalar_lea.sflag [#allocation3], 1
    %10 = vsyncpa %s9, 0
    %11 = vsyncpa [#allocation6], 0
    %s12 = scalar_lea.sflag [#allocation6], 1
    %13 = vsyncpa %s12, 0
    %14 = vsyncpa [#allocation4], 0
    %s15 = scalar_lea.sflag [#allocation4], 1
    %16 = vsyncpa %s15, 0
    loop: start=0, step=1, limit=20
    $region2: #{tpu_custom_call.1} parent=1 // loop_pre_header
      _
    $region3: #{tpu_custom_call.1} parent=1 // loop_header
      %s18 = sphi 0, %s22
      %p19 = scmp.ge.s32.totalorder %s18, 20
      %s25 = sphi 0, %s44
      %s26 = sphi 0, %s40
      %s27 = sphi 0, %s36
      %s28 = sphi 0, %s25
      %s29 = sphi 0, %s26
      %s30 = sphi 0, %s27
      %s31 = sphi 0, %s28
      %s32 = sphi 0, %s29
      %s33 = sphi 0, %s30
      %s47 = sphi 0, %s49
      %s50 = sphi 0, %s47
      %s51 = sphi 0, %s50
      %s67 = sphi 0, %s51
      %s77 = sphi 0, %s79
      %s80 = sphi 0, %s77
      %s81 = sphi 0, %s80
      %s97 = sphi 0, %s81
      %s107 = sphi 0, %s109
      %s110 = sphi 0, %s107
      %s111 = sphi 0, %s110
      %s127 = sphi 0, %s111
      %s137 = sphi 0, %s139
      %s140 = sphi 0, %s137
      %s141 = sphi 0, %s140
      %s157 = sphi 0, %s141
    $region4: #{tpu_custom_call.1} parent=1 // loop_header_branch
      %21 = sbr.rel (%p19) target = $region8
    $region5: #{tpu_custom_call.1} parent=1 // loop_body
      %s23 = ssub.s32 %s18, 1
      %s24 = ssub.s32 %s18, 2
      %s34 = sadd.s32 1, %s27
      %p35 = scmp.ge.s32.totalorder %s34, 1
      %s36 = scalar_select %p35, 0, %s34
      %s37 = sadd.s32 1, %s26
      %s38 = scalar_select %p35, %s37, %s26
      %p39 = scmp.ge.s32.totalorder %s38, 9
      %s40 = scalar_select %p39, 0, %s38
      %s41 = sadd.s32 1, %s25
      %s42 = scalar_select %p39, %s41, %s25
      %p43 = scmp.ge.s32.totalorder %s42, 2
      %s44 = scalar_select %p43, 0, %s42
      %s45 = ssub.s32 %s25, %s44
      %p46 = scmp.eq.s32.totalorder %s45, 0
      %s48 = sadd.s32 %s47, 1
      %s49 = scalar_select %p46, %s47, %s48
      %p52 = pneg %p46
      %p53 = scmp.eq.s32.totalorder %s18, 17
      %p54 = por %p52, %p53
      %p55 = scmp.ne.s32.totalorder %s47, %s50
      %p56 = scmp.eq.s32.totalorder %s18, 0
      %p57 = por %p55, %p56
      %p58 = scmp.ne.s32.totalorder %s47, %s50
      %p59 = scmp.eq.s32.totalorder %s23, 17
      %p60 = por %p58, %p59
      %p61 = scmp.ne.s32.totalorder %s50, %s51
      %p62 = scmp.eq.s32.totalorder %s23, 0
      %p63 = por %p61, %p62
      %p64 = scmp.ne.s32.totalorder %s50, %s51
      %p65 = scmp.eq.s32.totalorder %s24, 17
      %p66 = por %p64, %p65
      %p68 = scmp.ne.s32.totalorder %s51, %s67
      %p69 = scmp.eq.s32.totalorder %s24, 0
      %p70 = por %p68, %p69
      %s71 = ssub.s32 %s25, %s44
      %s72 = ssub.s32 %s26, %s40
      %s73 = sor.u32 %s71, %s72
      %s74 = ssub.s32 %s27, %s36
      %s75 = sor.u32 %s73, %s74
      %p76 = scmp.eq.s32.totalorder %s75, 0
      %s78 = sadd.s32 %s77, 1
      %s79 = scalar_select %p76, %s77, %s78
      %p82 = pneg %p76
      %p83 = scmp.eq.s32.totalorder %s18, 17
      %p84 = por %p82, %p83
      %p85 = scmp.ne.s32.totalorder %s77, %s80
      %p86 = scmp.eq.s32.totalorder %s18, 0
      %p87 = por %p85, %p86
      %p88 = scmp.ne.s32.totalorder %s77, %s80
      %p89 = scmp.eq.s32.totalorder %s23, 17
      %p90 = por %p88, %p89
      %p91 = scmp.ne.s32.totalorder %s80, %s81
      %p92 = scmp.eq.s32.totalorder %s23, 0
      %p93 = por %p91, %p92
      %p94 = scmp.ne.s32.totalorder %s80, %s81
      %p95 = scmp.eq.s32.totalorder %s24, 17
      %p96 = por %p94, %p95
      %p98 = scmp.ne.s32.totalorder %s81, %s97
      %p99 = scmp.eq.s32.totalorder %s24, 0
      %p100 = por %p98, %p99
      %s101 = ssub.s32 %s25, %s44
      %s102 = ssub.s32 %s26, %s40
      %s103 = sor.u32 %s101, %s102
      %s104 = ssub.s32 %s27, %s36
      %s105 = sor.u32 %s103, %s104
      %p106 = scmp.eq.s32.totalorder %s105, 0
      %s108 = sadd.s32 %s107, 1
      %s109 = scalar_select %p106, %s107, %s108
      %p112 = pneg %p106
      %p113 = scmp.eq.s32.totalorder %s18, 17
      %p114 = por %p112, %p113
      %p115 = scmp.ne.s32.totalorder %s107, %s110
      %p116 = scmp.eq.s32.totalorder %s18, 0
      %p117 = por %p115, %p116
      %p118 = scmp.ne.s32.totalorder %s107, %s110
      %p119 = scmp.eq.s32.totalorder %s23, 17
      %p120 = por %p118, %p119
      %p121 = scmp.ne.s32.totalorder %s110, %s111
      %p122 = scmp.eq.s32.totalorder %s23, 0
      %p123 = por %p121, %p122
      %p124 = scmp.ne.s32.totalorder %s110, %s111
      %p125 = scmp.eq.s32.totalorder %s24, 17
      %p126 = por %p124, %p125
      %p128 = scmp.ne.s32.totalorder %s111, %s127
      %p129 = scmp.eq.s32.totalorder %s24, 0
      %p130 = por %p128, %p129
      %s131 = sadd.s32 %s26, %s27
      %s132 = sadd.s32 %s40, %s36
      %s133 = ssub.s32 %s25, %s44
      %s134 = ssub.s32 %s131, %s132
      %s135 = sor.u32 %s133, %s134
      %p136 = scmp.eq.s32.totalorder %s135, 0
      %s138 = sadd.s32 %s137, 1
      %s139 = scalar_select %p136, %s137, %s138
      %p142 = pneg %p136
      %p143 = scmp.eq.s32.totalorder %s18, 17
      %p144 = por %p142, %p143
      %p145 = scmp.ne.s32.totalorder %s137, %s140
      %p146 = scmp.eq.s32.totalorder %s18, 0
      %p147 = por %p145, %p146
      %p148 = scmp.ne.s32.totalorder %s137, %s140
      %p149 = scmp.eq.s32.totalorder %s23, 17
      %p150 = por %p148, %p149
      %p151 = scmp.ne.s32.totalorder %s140, %s141
      %p152 = scmp.eq.s32.totalorder %s23, 0
      %p153 = por %p151, %p152
      %p154 = scmp.ne.s32.totalorder %s140, %s141
      %p155 = scmp.eq.s32.totalorder %s24, 17
      %p156 = por %p154, %p155
      %p158 = scmp.ne.s32.totalorder %s141, %s157
      %p159 = scmp.eq.s32.totalorder %s24, 0
      %p160 = por %p158, %p159
      %p161 = scmp.le.s32.totalorder 1, %s18
      %p162 = scmp.lt.s32.totalorder %s18, 19
      %p163 = pnand %p161, %p162
      %p164 = pneg %p163
      // Predicated region
      $region9: #{tpu_custom_call.1} parent=5 // pred_check
        _
      $region10: #{tpu_custom_call.1} parent=5 // pred_check_branch
        %166 = sbr.rel (%p163) target = $region12
      $region11: #{tpu_custom_call.1} parent=5 // pred_region
        %s167 = ssub.s32 %s18, 1
      $region12: #{tpu_custom_call.1} parent=5 // pred_fallthru
        _
      %p168 = scmp.lt.s32.totalorder %s18, 18
      // Predicated region
      $region13: #{tpu_custom_call.1} parent=5 // pred_check
        %p169 = pneg %p168
      $region14: #{tpu_custom_call.1} parent=5 // pred_check_branch
        %171 = sbr.rel (%p169) target = $region16
      $region15: #{tpu_custom_call.1} parent=5 // pred_region
        // Predicated region
        $region17: #{tpu_custom_call.1} parent=15 // pred_check
          %p172 = pneg %p57
        $region18: #{tpu_custom_call.1} parent=15 // pred_check_branch
          %174 = sbr.rel (%p172) target = $region20
        $region19: #{tpu_custom_call.1} parent=15 // pred_region
          %s175 = sand.u32 %s47, 1
          %s176 = scalar_lea.sflag [#allocation3], %s175
          %s177 = sand.u32 %s47, 1
          %s178 = smul.addr %s177, 4
          %s179 = scalar_lea.vmem [#allocation2], %s178
          %s181 = ssub.s32 64, 64
          %182 = vsyncadd %s176, %s181
          %s183 = smul.addr %s25, 2
          %s184 = smul.addr %s183, 32
          %s185 = scalar_lea.hbm %s0, %s184
          %s187 = sshll.u32 %s179, 4
          %s188 = int_to_ptr.vmem [resolvable:$true] %s187
          %190 = dma.hbm_to_vmem [thread:$0]  %s185, 64, %s188, %s176
        $region20: #{tpu_custom_call.1} parent=15 // pred_fallthru
          _
        // Predicated region
        $region21: #{tpu_custom_call.1} parent=15 // pred_check
          %p191 = pneg %p87
        $region22: #{tpu_custom_call.1} parent=15 // pred_check_branch
          %193 = sbr.rel (%p191) target = $region24
        $region23: #{tpu_custom_call.1} parent=15 // pred_region
          %s194 = sand.u32 %s18, 1
          %s195 = scalar_lea.sflag [#allocation6], %s194
          %s196 = sand.u32 %s77, 1
          %s197 = smul.addr %s196, 2
          %s198 = scalar_lea.vmem [#allocation5], %s197
          %s199 = smul.u32 2, %s27
          %s201 = ssub.s32 32, 32
          %202 = vsyncadd %s195, %s201
          %s203 = smul.addr %s26, 2
          %s204 = sadd.s32 %s199, %s203
          %s205 = smul.addr %s25, 18
          %s206 = sadd.s32 %s204, %s205
          %s207 = smul.addr %s206, 16
          %s208 = scalar_lea.hbm %s1, %s207
          %s210 = sshll.u32 %s198, 4
          %s211 = int_to_ptr.vmem [resolvable:$true] %s210
          %213 = dma.hbm_to_vmem [thread:$0]  %s208, 32, %s211, %s195
        $region24: #{tpu_custom_call.1} parent=15 // pred_fallthru
          _
        // Predicated region
        $region25: #{tpu_custom_call.1} parent=15 // pred_check
          %p214 = pneg %p117
        $region26: #{tpu_custom_call.1} parent=15 // pred_check_branch
          %216 = sbr.rel (%p214) target = $region28
        $region27: #{tpu_custom_call.1} parent=15 // pred_region
          %s217 = sand.u32 %s18, 1
          %s218 = scalar_lea.sflag [#allocation6], %s217
          %s219 = sand.u32 %s107, 1
          %s220 = smul.addr %s219, 2
          %s221 = scalar_lea.vmem [#allocation7], %s220
          %s222 = smul.u32 2, %s27
          %s224 = ssub.s32 32, 32
          %225 = vsyncadd %s218, %s224
          %s226 = smul.addr %s26, 2
          %s227 = sadd.s32 %s222, %s226
          %s228 = smul.addr %s25, 18
          %s229 = sadd.s32 %s227, %s228
          %s230 = smul.addr %s229, 16
          %s231 = scalar_lea.hbm %s2, %s230
          %s233 = sshll.u32 %s221, 4
          %s234 = int_to_ptr.vmem [resolvable:$true] %s233
          %236 = dma.hbm_to_vmem [thread:$0]  %s231, 32, %s234, %s218
        $region28: #{tpu_custom_call.1} parent=15 // pred_fallthru
          _
      $region16: #{tpu_custom_call.1} parent=5 // pred_fallthru
        _
      %p237 = scmp.le.s32.totalorder 1, %s18
      %p238 = scmp.lt.s32.totalorder %s18, 19
      %p239 = pnand %p237, %p238
      %p240 = pneg %p239
      // Predicated region
      $region29: #{tpu_custom_call.1} parent=5 // pred_check
        _
      $region30: #{tpu_custom_call.1} parent=5 // pred_check_branch
        %242 = sbr.rel (%p239) target = $region32
      $region31: #{tpu_custom_call.1} parent=5 // pred_region
        %s243 = ssub.s32 %s18, 1
        %s244 = sand.u32 %s50, 1
        %s245 = scalar_lea.sflag [#allocation3], %s244
        %s246 = sand.u32 %s50, 1
        %s247 = smul.addr %s246, 4
        %s248 = scalar_lea.vmem [#allocation2], %s247
        // Predicated region
        $region33: #{tpu_custom_call.1} parent=31 // pred_check
          %p249 = pneg %p63
        $region34: #{tpu_custom_call.1} parent=31 // pred_check_branch
          %251 = sbr.rel (%p249) target = $region36
        $region35: #{tpu_custom_call.1} parent=31 // pred_region
          %252 = dma.done %s245, 64
        $region36: #{tpu_custom_call.1} parent=31 // pred_fallthru
          _
        %s253 = sand.u32 %s23, 1
        %s254 = scalar_lea.sflag [#allocation6], %s253
        %s255 = sand.u32 %s80, 1
        %s256 = smul.addr %s255, 2
        %s257 = scalar_lea.vmem [#allocation5], %s256
        // Predicated region
        $region37: #{tpu_custom_call.1} parent=31 // pred_check
          %p258 = pneg %p93
        $region38: #{tpu_custom_call.1} parent=31 // pred_check_branch
          %260 = sbr.rel (%p258) target = $region40
        $region39: #{tpu_custom_call.1} parent=31 // pred_region
          %261 = dma.done %s254, 32
        $region40: #{tpu_custom_call.1} parent=31 // pred_fallthru
          _
        %s262 = sand.u32 %s23, 1
        %s263 = scalar_lea.sflag [#allocation6], %s262
        %s264 = sand.u32 %s110, 1
        %s265 = smul.addr %s264, 2
        %s266 = scalar_lea.vmem [#allocation7], %s265
        // Predicated region
        $region41: #{tpu_custom_call.1} parent=31 // pred_check
          %p267 = pneg %p123
        $region42: #{tpu_custom_call.1} parent=31 // pred_check_branch
          %269 = sbr.rel (%p267) target = $region44
        $region43: #{tpu_custom_call.1} parent=31 // pred_region
          %270 = dma.done %s263, 32
        $region44: #{tpu_custom_call.1} parent=31 // pred_fallthru
          _
        %s271 = sand.u32 %s50, 1
        %s272 = scalar_lea.sflag [#allocation3], %s271
        %s273 = sand.u32 %s50, 1
        %s274 = smul.addr %s273, 4
        %s275 = scalar_lea.vmem [#allocation2], %s274
        %p276 = pneg %p63
        %p277 = pneg %p60
        %s278 = sand.u32 %s23, 1
        %s279 = scalar_lea.sflag [#allocation6], %s278
        %s280 = sand.u32 %s80, 1
        %s281 = smul.addr %s280, 2
        %s282 = scalar_lea.vmem [#allocation5], %s281
        %p283 = pneg %p93
        %p284 = pneg %p90
        %s285 = sand.u32 %s23, 1
        %s286 = scalar_lea.sflag [#allocation6], %s285
        %s287 = sand.u32 %s110, 1
        %s288 = smul.addr %s287, 2
        %s289 = scalar_lea.vmem [#allocation7], %s288
        %p290 = pneg %p123
        %p291 = pneg %p120
        %p292 = pneg %p153
        %p293 = pneg %p150
        %s294 = sand.u32 %s140, 1
        %s295 = scalar_lea.sflag [#allocation4], %s294
        %s296 = sand.u32 %s140, 1
        %s297 = smul.addr %s296, 8
        %s298 = scalar_lea.vmem [#allocation8], %s297
        %s299 = smul.u32 2, %s30
        %s300 = smul.u32 2, %s30
        %s301 = sadd.s32 %s29, %s30
        %s302 = smul.u32 2, %s301
        %v303 = vlaneseq
        %v304 = vshrl.u32 %v303, 7
        %v305 = vadd.s32 %v304, 8
        %v306 = vcvt.s32.f32 %v304
        %v307 = vcvt.s32.f32 %v305
        %v308 = vld [vmem:[%s257] sm:$0x3]
        %v309 = vld [vmem:[%s266] sm:$0x3]
        %vm310 = vcmp.gt.f32.partialorder %v308, -1.0
        %vm311 = vcmp.lt.f32.partialorder %v308, 16.0
        %vm312 = vmand %vm310, %vm311
        %vm313 = vcmp.gt.f32.partialorder %v309, -1.0
        %vm314 = vmand %vm312, %vm313
        %vm315 = vcmp.lt.f32.partialorder %v309, 16.0
        %vm316 = vmand %vm314, %vm315
        %v317 = vsel %vm316, 1, 0
        %v318 = vcvt.s32.f32 %v317
        %v320 = vlaneseq
        %v321 = vshrl.u32 %v320, 7
        %v322 = vsub.s32 0, %v321
        %v323 = vrot.slane %v308, %v322
        %v324 = vlaneseq
        %v325 = vshrl.u32 %v324, 7
        %v326 = vsub.s32 1, %v325
        %v327 = vrot.slane %v308, %v326
        %v330 = vsub.f32 %v323, %v306
        %v331 = vsub.f32 %v327, %v306
        %v332 = vsub.f32 %v323, %v307
        %v333 = vsub.f32 %v327, %v307
        %v334 = vand.u32 2147483647, %v330
        %v335 = vand.u32 2147483647, %v331
        %v336 = vand.u32 2147483647, %v332
        %v337 = vand.u32 2147483647, %v333
        %v338 = vsub.f32 1.0, %v334
        %v339 = vsub.f32 1.0, %v335
        %v340 = vsub.f32 1.0, %v336
        %v341 = vsub.f32 1.0, %v337
        %v342 = vmax.f32 %v338, 0.0
        %v343 = vmax.f32 %v339, 0.0
        %v344 = vmax.f32 %v340, 0.0
        %v345 = vmax.f32 %v341, 0.0
        %v347 = vlaneseq
        %v348 = vshrl.u32 %v347, 7
        %v349 = vsub.s32 0, %v348
        %v350 = vrot.slane %v318, %v349
        %v351 = vlaneseq
        %v352 = vshrl.u32 %v351, 7
        %v353 = vsub.s32 1, %v352
        %v354 = vrot.slane %v318, %v353
        %v357 = vmul.f32 %v342, %v350
        %v358 = vmul.f32 %v343, %v354
        %v359 = vmul.f32 %v344, %v350
        %v360 = vmul.f32 %v345, %v354
        %v362 = vlaneseq
        %v363 = vshrl.u32 %v362, 7
        %v364 = vsub.s32 0, %v363
        %v365 = vrot.slane %v309, %v364
        %v366 = vlaneseq
        %v367 = vshrl.u32 %v366, 7
        %v368 = vsub.s32 1, %v367
        %v369 = vrot.slane %v309, %v368
        %v372 = vsub.f32 %v365, %v306
        %v373 = vsub.f32 %v369, %v306
        %v374 = vsub.f32 %v365, %v307
        %v375 = vsub.f32 %v369, %v307
        %v376 = vand.u32 2147483647, %v372
        %v377 = vand.u32 2147483647, %v373
        %v378 = vand.u32 2147483647, %v374
        %v379 = vand.u32 2147483647, %v375
        %v380 = vsub.f32 1.0, %v376
        %v381 = vsub.f32 1.0, %v377
        %v382 = vsub.f32 1.0, %v378
        %v383 = vsub.f32 1.0, %v379
        %v384 = vmax.f32 %v380, 0.0
        %v385 = vmax.f32 %v381, 0.0
        %v386 = vmax.f32 %v382, 0.0
        %v387 = vmax.f32 %v383, 0.0
        %v392 = vcombine.low %v357, %v358
        %v393 = vcombine.high %v357, %v358
        %v395 = vunpack.c.l.s4 1966171168
        %v396 = vunpack.c.0.s8 %v395
        %v397 = vlaneseq
        %v398 = vshrl.u32 %v397, 7
        %v399 = vsub.s32 %v396, %v398
        %v400 = vrot.slane %v392, %v399
        %v402 = vunpack.c.l.s4 1966171168
        %v403 = vunpack.c.0.s8 %v402
        %v404 = vlaneseq
        %v405 = vshrl.u32 %v404, 7
        %v406 = vsub.s32 %v403, %v405
        %v407 = vrot.slane %v393, %v406
        %v408 = vcombine.high %v400, %v400
        %v409 = vcombine.high %v407, %v407
        %v411 = vunpack.c.l.s4 1966171168
        %v412 = vunpack.c.0.s8 %v411
        %v413 = vlaneseq
        %v414 = vshrl.u32 %v413, 7
        %v415 = vsub.s32 %v412, %v414
        %v416 = vrot.slane %v400, %v415
        %v418 = vunpack.c.l.s4 1966171168
        %v419 = vunpack.c.0.s8 %v418
        %v420 = vlaneseq
        %v421 = vshrl.u32 %v420, 7
        %v422 = vsub.s32 %v419, %v421
        %v423 = vrot.slane %v407, %v422
        %v425 = vunpack.c.l.s4 1966171168
        %v426 = vunpack.c.0.s8 %v425
        %v427 = vlaneseq
        %v428 = vshrl.u32 %v427, 7
        %v429 = vsub.s32 %v426, %v428
        %v430 = vrot.slane %v408, %v429
        %v432 = vunpack.c.l.s4 1966171168
        %v433 = vunpack.c.0.s8 %v432
        %v434 = vlaneseq
        %v435 = vshrl.u32 %v434, 7
        %v436 = vsub.s32 %v433, %v435
        %v437 = vrot.slane %v409, %v436
        %v438 = vcombine.high %v416, %v416
        %v439 = vcombine.high %v423, %v423
        %v440 = vcombine.high %v430, %v430
        %v441 = vcombine.high %v437, %v437
        %v442 = vcombine.low %v359, %v360
        %v443 = vcombine.high %v359, %v360
        %v445 = vunpack.c.l.s4 1966171168
        %v446 = vunpack.c.0.s8 %v445
        %v447 = vlaneseq
        %v448 = vshrl.u32 %v447, 7
        %v449 = vsub.s32 %v446, %v448
        %v450 = vrot.slane %v442, %v449
        %v452 = vunpack.c.l.s4 1966171168
        %v453 = vunpack.c.0.s8 %v452
        %v454 = vlaneseq
        %v455 = vshrl.u32 %v454, 7
        %v456 = vsub.s32 %v453, %v455
        %v457 = vrot.slane %v443, %v456
        %v458 = vcombine.high %v450, %v450
        %v459 = vcombine.high %v457, %v457
        %v461 = vunpack.c.l.s4 1966171168
        %v462 = vunpack.c.0.s8 %v461
        %v463 = vlaneseq
        %v464 = vshrl.u32 %v463, 7
        %v465 = vsub.s32 %v462, %v464
        %v466 = vrot.slane %v450, %v465
        %v468 = vunpack.c.l.s4 1966171168
        %v469 = vunpack.c.0.s8 %v468
        %v470 = vlaneseq
        %v471 = vshrl.u32 %v470, 7
        %v472 = vsub.s32 %v469, %v471
        %v473 = vrot.slane %v457, %v472
        %v475 = vunpack.c.l.s4 1966171168
        %v476 = vunpack.c.0.s8 %v475
        %v477 = vlaneseq
        %v478 = vshrl.u32 %v477, 7
        %v479 = vsub.s32 %v476, %v478
        %v480 = vrot.slane %v458, %v479
        %v482 = vunpack.c.l.s4 1966171168
        %v483 = vunpack.c.0.s8 %v482
        %v484 = vlaneseq
        %v485 = vshrl.u32 %v484, 7
        %v486 = vsub.s32 %v483, %v485
        %v487 = vrot.slane %v459, %v486
        %v488 = vcombine.high %v466, %v466
        %v489 = vcombine.high %v473, %v473
        %v490 = vcombine.high %v480, %v480
        %v491 = vcombine.high %v487, %v487
        %v492 = vlaneseq
        %v493 = vshrl.u32 %v492, 7
        %v494 = vsub.s32 0, %v493
        %v495 = vrot.slane %v416, %v494
        %v496 = vlaneseq
        %v497 = vshrl.u32 %v496, 7
        %v498 = vsub.s32 1, %v497
        %v499 = vrot.slane %v416, %v498
        %v500 = vlaneseq
        %v501 = vshrl.u32 %v500, 7
        %v502 = vsub.s32 0, %v501
        %v503 = vrot.slane %v430, %v502
        %v504 = vlaneseq
        %v505 = vshrl.u32 %v504, 7
        %v506 = vsub.s32 1, %v505
        %v507 = vrot.slane %v430, %v506
        %v508 = vlaneseq
        %v509 = vshrl.u32 %v508, 7
        %v510 = vsub.s32 0, %v509
        %v511 = vrot.slane %v438, %v510
        %v512 = vlaneseq
        %v513 = vshrl.u32 %v512, 7
        %v514 = vsub.s32 1, %v513
        %v515 = vrot.slane %v438, %v514
        %v516 = vlaneseq
        %v517 = vshrl.u32 %v516, 7
        %v518 = vsub.s32 0, %v517
        %v519 = vrot.slane %v440, %v518
        %v520 = vlaneseq
        %v521 = vshrl.u32 %v520, 7
        %v522 = vsub.s32 1, %v521
        %v523 = vrot.slane %v440, %v522
        %v524 = vlaneseq
        %v525 = vshrl.u32 %v524, 7
        %v526 = vsub.s32 0, %v525
        %v527 = vrot.slane %v423, %v526
        %v528 = vlaneseq
        %v529 = vshrl.u32 %v528, 7
        %v530 = vsub.s32 1, %v529
        %v531 = vrot.slane %v423, %v530
        %v532 = vlaneseq
        %v533 = vshrl.u32 %v532, 7
        %v534 = vsub.s32 0, %v533
        %v535 = vrot.slane %v437, %v534
        %v536 = vlaneseq
        %v537 = vshrl.u32 %v536, 7
        %v538 = vsub.s32 1, %v537
        %v539 = vrot.slane %v437, %v538
        %v540 = vlaneseq
        %v541 = vshrl.u32 %v540, 7
        %v542 = vsub.s32 0, %v541
        %v543 = vrot.slane %v439, %v542
        %v544 = vlaneseq
        %v545 = vshrl.u32 %v544, 7
        %v546 = vsub.s32 1, %v545
        %v547 = vrot.slane %v439, %v546
        %v548 = vlaneseq
        %v549 = vshrl.u32 %v548, 7
        %v550 = vsub.s32 0, %v549
        %v551 = vrot.slane %v441, %v550
        %v552 = vlaneseq
        %v553 = vshrl.u32 %v552, 7
        %v554 = vsub.s32 1, %v553
        %v555 = vrot.slane %v441, %v554
        %v556 = vlaneseq
        %v557 = vshrl.u32 %v556, 7
        %v558 = vsub.s32 0, %v557
        %v559 = vrot.slane %v466, %v558
        %v560 = vlaneseq
        %v561 = vshrl.u32 %v560, 7
        %v562 = vsub.s32 1, %v561
        %v563 = vrot.slane %v466, %v562
        %v564 = vlaneseq
        %v565 = vshrl.u32 %v564, 7
        %v566 = vsub.s32 0, %v565
        %v567 = vrot.slane %v480, %v566
        %v568 = vlaneseq
        %v569 = vshrl.u32 %v568, 7
        %v570 = vsub.s32 1, %v569
        %v571 = vrot.slane %v480, %v570
        %v572 = vlaneseq
        %v573 = vshrl.u32 %v572, 7
        %v574 = vsub.s32 0, %v573
        %v575 = vrot.slane %v488, %v574
        %v576 = vlaneseq
        %v577 = vshrl.u32 %v576, 7
        %v578 = vsub.s32 1, %v577
        %v579 = vrot.slane %v488, %v578
        %v580 = vlaneseq
        %v581 = vshrl.u32 %v580, 7
        %v582 = vsub.s32 0, %v581
        %v583 = vrot.slane %v490, %v582
        %v584 = vlaneseq
        %v585 = vshrl.u32 %v584, 7
        %v586 = vsub.s32 1, %v585
        %v587 = vrot.slane %v490, %v586
        %v588 = vlaneseq
        %v589 = vshrl.u32 %v588, 7
        %v590 = vsub.s32 0, %v589
        %v591 = vrot.slane %v473, %v590
        %v592 = vlaneseq
        %v593 = vshrl.u32 %v592, 7
        %v594 = vsub.s32 1, %v593
        %v595 = vrot.slane %v473, %v594
        %v596 = vlaneseq
        %v597 = vshrl.u32 %v596, 7
        %v598 = vsub.s32 0, %v597
        %v599 = vrot.slane %v487, %v598
        %v600 = vlaneseq
        %v601 = vshrl.u32 %v600, 7
        %v602 = vsub.s32 1, %v601
        %v603 = vrot.slane %v487, %v602
        %v604 = vlaneseq
        %v605 = vshrl.u32 %v604, 7
        %v606 = vsub.s32 0, %v605
        %v607 = vrot.slane %v489, %v606
        %v608 = vlaneseq
        %v609 = vshrl.u32 %v608, 7
        %v610 = vsub.s32 1, %v609
        %v611 = vrot.slane %v489, %v610
        %v612 = vlaneseq
        %v613 = vshrl.u32 %v612, 7
        %v614 = vsub.s32 0, %v613
        %v615 = vrot.slane %v491, %v614
        %v616 = vlaneseq
        %v617 = vshrl.u32 %v616, 7
        %v618 = vsub.s32 1, %v617
        %v619 = vrot.slane %v491, %v618
        %v652 = vmul.f32 %v495, %v384
        %v653 = vmul.f32 %v499, %v385
        %v654 = vmul.f32 %v495, %v386
        %v655 = vmul.f32 %v499, %v387
        %v656 = vmul.f32 %v503, %v384
        %v657 = vmul.f32 %v507, %v385
        %v658 = vmul.f32 %v503, %v386
        %v659 = vmul.f32 %v507, %v387
        %v660 = vmul.f32 %v511, %v384
        %v661 = vmul.f32 %v515, %v385
        %v662 = vmul.f32 %v511, %v386
        %v663 = vmul.f32 %v515, %v387
        %v664 = vmul.f32 %v519, %v384
        %v665 = vmul.f32 %v523, %v385
        %v666 = vmul.f32 %v519, %v386
        %v667 = vmul.f32 %v523, %v387
        %v668 = vmul.f32 %v527, %v384
        %v669 = vmul.f32 %v531, %v385
        %v670 = vmul.f32 %v527, %v386
        %v671 = vmul.f32 %v531, %v387
        %v672 = vmul.f32 %v535, %v384
        %v673 = vmul.f32 %v539, %v385
        %v674 = vmul.f32 %v535, %v386
        %v675 = vmul.f32 %v539, %v387
        %v676 = vmul.f32 %v543, %v384
        %v677 = vmul.f32 %v547, %v385
        %v678 = vmul.f32 %v543, %v386
        %v679 = vmul.f32 %v547, %v387
        %v680 = vmul.f32 %v551, %v384
        %v681 = vmul.f32 %v555, %v385
        %v682 = vmul.f32 %v551, %v386
        %v683 = vmul.f32 %v555, %v387
        %v684 = vmul.f32 %v559, %v384
        %v685 = vmul.f32 %v563, %v385
        %v686 = vmul.f32 %v559, %v386
        %v687 = vmul.f32 %v563, %v387
        %v688 = vmul.f32 %v567, %v384
        %v689 = vmul.f32 %v571, %v385
        %v690 = vmul.f32 %v567, %v386
        %v691 = vmul.f32 %v571, %v387
        %v692 = vmul.f32 %v575, %v384
        %v693 = vmul.f32 %v579, %v385
        %v694 = vmul.f32 %v575, %v386
        %v695 = vmul.f32 %v579, %v387
        %v696 = vmul.f32 %v583, %v384
        %v697 = vmul.f32 %v587, %v385
        %v698 = vmul.f32 %v583, %v386
        %v699 = vmul.f32 %v587, %v387
        %v700 = vmul.f32 %v591, %v384
        %v701 = vmul.f32 %v595, %v385
        %v702 = vmul.f32 %v591, %v386
        %v703 = vmul.f32 %v595, %v387
        %v704 = vmul.f32 %v599, %v384
        %v705 = vmul.f32 %v603, %v385
        %v706 = vmul.f32 %v599, %v386
        %v707 = vmul.f32 %v603, %v387
        %v708 = vmul.f32 %v607, %v384
        %v709 = vmul.f32 %v611, %v385
        %v710 = vmul.f32 %v607, %v386
        %v711 = vmul.f32 %v611, %v387
        %v712 = vmul.f32 %v615, %v384
        %v713 = vmul.f32 %v619, %v385
        %v714 = vmul.f32 %v615, %v386
        %v715 = vmul.f32 %v619, %v387
        %v716 = vld [vmem:[%s248] sm:$0xf]
        %v717 = vpack.c.bf16 %v654, %v652
        %v718 = vpack.c.bf16 %v655, %v653
        %v719 = vpack.c.bf16 %v658, %v656
        %v720 = vpack.c.bf16 %v659, %v657
        %v721 = vpack.c.bf16 %v662, %v660
        %v722 = vpack.c.bf16 %v663, %v661
        %v723 = vpack.c.bf16 %v666, %v664
        %v724 = vpack.c.bf16 %v667, %v665
        %v725 = vpack.c.bf16 %v670, %v668
        %v726 = vpack.c.bf16 %v671, %v669
        %v727 = vpack.c.bf16 %v674, %v672
        %v728 = vpack.c.bf16 %v675, %v673
        %v729 = vpack.c.bf16 %v678, %v676
        %v730 = vpack.c.bf16 %v679, %v677
        %v731 = vpack.c.bf16 %v682, %v680
        %v732 = vpack.c.bf16 %v683, %v681
        %v733 = vpack.c.bf16 %v686, %v684
        %v734 = vpack.c.bf16 %v687, %v685
        %v735 = vpack.c.bf16 %v690, %v688
        %v736 = vpack.c.bf16 %v691, %v689
        %v737 = vpack.c.bf16 %v694, %v692
        %v738 = vpack.c.bf16 %v695, %v693
        %v739 = vpack.c.bf16 %v698, %v696
        %v740 = vpack.c.bf16 %v699, %v697
        %v741 = vpack.c.bf16 %v702, %v700
        %v742 = vpack.c.bf16 %v703, %v701
        %v743 = vpack.c.bf16 %v706, %v704
        %v744 = vpack.c.bf16 %v707, %v705
        %v745 = vpack.c.bf16 %v710, %v708
        %v746 = vpack.c.bf16 %v711, %v709
        %v747 = vpack.c.bf16 %v714, %v712
        %v748 = vpack.c.bf16 %v715, %v713
        %v751 = vunpack.c.l.s4 1983009808
        %v752 = vunpack.c.0.s8 %v751
        %v753 = vlaneseq
        %v754 = vshrl.u32 %v753, 7
        %v755 = vsub.s32 %v752, %v754
        %v756 = vrot.slane %v716, %v755
        %v757 = vcombine.high %v756, %v756
        %760 = vmatprep.subr.bf16.mxu0 %v718
        %761 = vmatpush1.bf16.msra.mxu0 %v717
        %762 = vmatprep.subr.bf16.mxu0 %v720
        %763 = vmatpush1.bf16.msra.mxu0 %v719
        %764 = vmatprep.subr.bf16.mxu0 %v722
        %765 = vmatpush1.bf16.msra.mxu0 %v721
        %766 = vmatprep.subr.bf16.mxu0 %v724
        %767 = vmatpush1.bf16.msra.mxu0 %v723
        %768 = vmatprep.subr.bf16.mxu0 %v726
        %769 = vmatpush1.bf16.msra.mxu0 %v725
        %770 = vmatprep.subr.bf16.mxu0 %v728
        %771 = vmatpush1.bf16.msra.mxu0 %v727
        %772 = vmatprep.subr.bf16.mxu0 %v730
        %773 = vmatpush1.bf16.msra.mxu0 %v729
        %774 = vmatprep.subr.bf16.mxu0 %v732
        %775 = vmatpush1.bf16.msra.mxu0 %v731
        %776 = vmatprep.subr.bf16.mxu0 %v734
        %777 = vmatpush1.bf16.msra.mxu0 %v733
        %778 = vmatprep.subr.bf16.mxu0 %v736
        %779 = vmatpush1.bf16.msra.mxu0 %v735
        %780 = vmatprep.subr.bf16.mxu0 %v738
        %781 = vmatpush1.bf16.msra.mxu0 %v737
        %782 = vmatprep.subr.bf16.mxu0 %v740
        %783 = vmatpush1.bf16.msra.mxu0 %v739
        %784 = vmatprep.subr.bf16.mxu0 %v742
        %785 = vmatpush1.bf16.msra.mxu0 %v741
        %786 = vmatprep.subr.bf16.mxu0 %v744
        %787 = vmatpush1.bf16.msra.mxu0 %v743
        %788 = vmatprep.subr.bf16.mxu0 %v746
        %789 = vmatpush1.bf16.msra.mxu0 %v745
        %790 = vmatprep.subr.bf16.mxu0 %v748
        %791 = vmatpush1.bf16.msra.mxu0 %v747
        %792 = vmatprep.mubr.bf16.mxu0 %v757
        %793 = vmatmul.mubr.bf16.gmra.mrb[0].mxu0 %v756
        %v794 = vpop.f32.mrb[0].mxu0
        %v795 = vadd.f32 0.0, %v794
        %v796 = vpop.f32.mrb[0].mxu0
        %v797 = vadd.f32 0.0, %v796
        %v798 = vpop.f32.mrb[0].mxu0
        %v799 = vpop.f32.mrb[0].mxu0
        %800 = vdwg.mxu0
        %v803 = vcombine.low %v795, %v797
        %805 = vst [vmem:[%s298] sm:$0xff] %v803
        %s806 = sand.u32 %s140, 1
        %s807 = scalar_lea.sflag [#allocation4], %s806
        %s808 = sand.u32 %s140, 1
        %s809 = smul.addr %s808, 8
        %s810 = scalar_lea.vmem [#allocation8], %s809
        // Predicated region
        $region45: #{tpu_custom_call.1} parent=31 // pred_check
          %p811 = pneg %p150
        $region46: #{tpu_custom_call.1} parent=31 // pred_check_branch
          %813 = sbr.rel (%p811) target = $region48
        $region47: #{tpu_custom_call.1} parent=31 // pred_region
          %s814 = sadd.s32 %s29, %s30
          %s815 = smul.u32 2, %s814
          %s817 = ssub.s32 128, 128
          %818 = vsyncadd %s807, %s817
          %s819 = smul.addr %s28, 18
          %s820 = sadd.s32 %s815, %s819
          %s821 = smul.addr %s820, 64
          %s822 = scalar_lea.hbm %s3, %s821
          %s824 = sshll.u32 %s810, 4
          %s825 = int_to_ptr.vmem [resolvable:$true] %s824
          %827 = dma.vmem_to_hbm [thread:$0]  %s825, 128, %s822, %s807
        $region48: #{tpu_custom_call.1} parent=31 // pred_fallthru
          _
      $region32: #{tpu_custom_call.1} parent=5 // pred_fallthru
        _
      %p828 = scmp.le.s32.totalorder 2, %s18
      // Predicated region
      $region49: #{tpu_custom_call.1} parent=5 // pred_check
        %p829 = pneg %p828
      $region50: #{tpu_custom_call.1} parent=5 // pred_check_branch
        %831 = sbr.rel (%p829) target = $region52
      $region51: #{tpu_custom_call.1} parent=5 // pred_region
        %s832 = ssub.s32 %s18, 2
        // Predicated region
        $region53: #{tpu_custom_call.1} parent=51 // pred_check
          %p833 = pneg %p156
        $region54: #{tpu_custom_call.1} parent=51 // pred_check_branch
          %835 = sbr.rel (%p833) target = $region56
        $region55: #{tpu_custom_call.1} parent=51 // pred_region
          %s836 = sand.u32 %s141, 1
          %s837 = scalar_lea.sflag [#allocation4], %s836
          %s838 = sand.u32 %s141, 1
          %s839 = smul.addr %s838, 8
          %s840 = scalar_lea.vmem [#allocation8], %s839
          %841 = dma.done %s837, 128
        $region56: #{tpu_custom_call.1} parent=51 // pred_fallthru
          _
      $region52: #{tpu_custom_call.1} parent=5 // pred_fallthru
        _
    $region6: #{tpu_custom_call.1} parent=1 // loop_footer
      %s22 = sadd.s32 1, %s18
    $region7: #{tpu_custom_call.1} parent=1 // loop_footer_branch
      %17 = sbr.rel target = $region3
    $region8: #{tpu_custom_call.1} parent=1 // loop_exit
      _
    %842 = vsyncpa [#allocation3], 1
    %s843 = scalar_lea.sflag [#allocation3], 1
    %844 = vsyncpa %s843, 1
    %845 = vsyncpa [#allocation6], 1
    %s846 = scalar_lea.sflag [#allocation6], 1
    %847 = vsyncpa %s846, 1
    %848 = vsyncpa [#allocation4], 1
    %s849 = scalar_lea.sflag [#allocation4], 1
    %850 = vsyncpa %s849, 1

</llo_original>
